<compile_context>
chip_gen: v5e
topology: v5e:2x2
jax: 0.10.0
libtpu: 0.0.40
codegen_flags: <defaults>
</compile_context>

<pallas_src>
import functools
import math

import jax
import jax.numpy as jnp
from jax.experimental import pallas as pl
from jax.experimental.pallas import tpu as pltpu


def _attention_pool_kernel(x_ref, pos0_ref, poss_ref, wq_ref, bq_ref,
                           wk_ref, bk_ref, wv_ref, bv_ref, wc_ref, bc_ref,
                           sel_ref, o_ref, *, num_heads):
    # x_ref    : (BB, C, T)       spatial tokens, channels-first (NCHW view)
    # pos0_ref : (1, C)           positional embedding of the mean token
    # poss_ref : (T, C)           positional embedding of the spatial tokens
    # w*_ref   : (C, C) / (C, D)  projection weights, (in, out) layout
    # b*_ref   : (1, C) / (1, D)  biases, lane-major
    # sel_ref  : (C, H)           one-hot head membership of each channel
    # o_ref    : (BB, D)          pooled output (lane dense)
    BB, C, T = x_ref.shape
    ch = C // num_heads
    qk_scale = 1.0 / math.sqrt(ch)          # (ch ** -0.25) ** 2 folded into q

    pos0 = pos0_ref[...]                    # (1, C)
    poss = poss_ref[...]                    # (T, C)
    sel = sel_ref[...]                      # (C, H)
    sel_t = sel.T                           # (H, C)
    wq, wk, wv, wc = wq_ref[...], wk_ref[...], wv_ref[...], wc_ref[...]
    bq, bk, bv, bc = bq_ref[...], bk_ref[...], bv_ref[...], bc_ref[...]

    # ---- channels-last spatial tokens and the mean-token query, per batch ----
    x_t = []
    tok0 = []
    for b in range(BB):
        xb = x_ref[b].T                                          # (T, C)
        x_t.append(xb)
        tok0.append(jnp.mean(xb, axis=0, keepdims=True) + pos0)  # (1, C)
    token0 = jnp.concatenate(tok0, axis=0)                       # (BB, C)

    # single query per batch element (only output token 0 is used)
    q = (jnp.dot(token0, wq, preferred_element_type=jnp.float32) + bq) * qk_scale

    # ---- attention of the mean-token query over all L = T + 1 tokens ----
    a_rows = []
    for b in range(BB):
        tokens = jnp.concatenate([tok0[b], x_t[b] + poss], axis=0)        # (L, C)
        k = jnp.dot(tokens, wk, preferred_element_type=jnp.float32) + bk  # (L, C)
        v = jnp.dot(tokens, wv, preferred_element_type=jnp.float32) + bv  # (L, C)

        # per-head scores: s[l, h] = sum_{c in head h} q[c] * k[l, c]
        s = jnp.dot(q[b:b + 1, :] * k, sel,
                    preferred_element_type=jnp.float32)                   # (L, H)
        m = jnp.max(s, axis=0, keepdims=True)                             # (1, H)
        e = jnp.exp(s - m)                                                # (L, H)
        denom = jnp.sum(e, axis=0, keepdims=True)                         # (1, H)
        w = e * pl.reciprocal(denom)                                      # (L, H)

        # broadcast per-head weights back to their channels and apply to v
        w_c = jnp.dot(w, sel_t, preferred_element_type=jnp.float32)       # (L, C)
        a_rows.append(jnp.sum(w_c * v, axis=0, keepdims=True))            # (1, C)

    a = jnp.concatenate(a_rows, axis=0)                                   # (BB, C)
    out = jnp.dot(a, wc, preferred_element_type=jnp.float32) + bc         # (BB, D)
    o_ref[...] = out.astype(o_ref.dtype)


def attention_pool_2d(x, pos_emb, w_qkv, b_qkv, w_c, b_c, num_heads):
    """x: [B, C, H, W] (NCHW).  Returns [B, output_dim]."""
    B, C, H, W = x.shape
    T = H * W
    D = w_c.shape[0]
    ch = C // num_heads
    f32 = jnp.float32

    x_flat = x.reshape(B, C, T).astype(f32)       # contiguous view, no pad

    # one grid step handles a block of BB batch elements
    BB = min(B, 8)
    n_blocks = (B + BB - 1) // BB
    B_pad = n_blocks * BB
    if B_pad != B:
        x_flat = jnp.pad(x_flat, ((0, B_pad - B), (0, 0), (0, 0)))

    # parameter re-layouts (tiny, one time): weights -> (in, out), biases lane-major
    wq_t = w_qkv[0:C, :].T.astype(f32)            # (C, C)
    wk_t = w_qkv[C:2 * C, :].T.astype(f32)        # (C, C)
    wv_t = w_qkv[2 * C:3 * C, :].T.astype(f32)    # (C, C)
    bq = b_qkv[0:C].reshape(1, C).astype(f32)
    bk = b_qkv[C:2 * C].reshape(1, C).astype(f32)
    bv = b_qkv[2 * C:3 * C].reshape(1, C).astype(f32)
    wc_t = w_c.T.astype(f32)                      # (C, D)
    bc = b_c.reshape(1, D).astype(f32)
    pos0 = pos_emb[:, 0:1].T.astype(f32)          # (1, C)   mean-token pos
    poss = pos_emb[:, 1:].T.astype(f32)           # (T, C)   spatial pos
    sel = (jnp.arange(C)[:, None] // ch ==
           jnp.arange(num_heads)[None, :]).astype(f32)        # (C, H)

    kernel = functools.partial(_attention_pool_kernel, num_heads=num_heads)
    out = pl.pallas_call(
        kernel,
        out_shape=jax.ShapeDtypeStruct((B_pad, D), f32),
        grid=(n_blocks,),
        in_specs=[
            pl.BlockSpec((BB, C, T), lambda b: (b, 0, 0)),      # x (batch block)
            pl.BlockSpec((1, C), lambda b: (0, 0)),             # pos0
            pl.BlockSpec((T, C), lambda b: (0, 0)),             # pos spatial
            pl.BlockSpec((C, C), lambda b: (0, 0)),             # Wq
            pl.BlockSpec((1, C), lambda b: (0, 0)),             # bq
            pl.BlockSpec((C, C), lambda b: (0, 0)),             # Wk
            pl.BlockSpec((1, C), lambda b: (0, 0)),             # bk
            pl.BlockSpec((C, C), lambda b: (0, 0)),             # Wv
            pl.BlockSpec((1, C), lambda b: (0, 0)),             # bv
            pl.BlockSpec((C, D), lambda b: (0, 0)),             # Wc
            pl.BlockSpec((1, D), lambda b: (0, 0)),             # bc
            pl.BlockSpec((C, num_heads), lambda b: (0, 0)),     # head selector
        ],
        out_specs=pl.BlockSpec((BB, D), lambda b: (b, 0)),      # lane-dense
        compiler_params=pltpu.CompilerParams(
            dimension_semantics=("parallel",)),
    )(x_flat, pos0, poss, wq_t, bq, wk_t, bk, wv_t, bv, wc_t, bc, sel)
    return out[:B]


def _reference(x, pos_emb, w_qkv, b_qkv, w_c, b_c, num_heads):
    """Pure-JAX re-implementation of the PyTorch forward pass."""
    B, C, H, W = x.shape
    xf = x.reshape(B, C, -1)
    xf = jnp.concatenate([xf.mean(axis=-1, keepdims=True), xf], axis=-1)
    xf = xf + pos_emb[None]
    qkv = jnp.einsum('oc,bcl->bol', w_qkv, xf) + b_qkv[None, :, None]

    bs, width, length = qkv.shape
    ch = width // (3 * num_heads)
    q, k, v = jnp.split(qkv, 3, axis=1)
    scale = 1.0 / math.sqrt(math.sqrt(ch))
    q = (q * scale).reshape(bs * num_heads, ch, length)
    k = (k * scale).reshape(bs * num_heads, ch, length)
    v = v.reshape(bs * num_heads, ch, length)
    w = jnp.einsum('bct,bcs->bts', q, k)
    w = jax.nn.softmax(w, axis=-1)
    a = jnp.einsum('bts,bcs->bct', w, v).reshape(bs, -1, length)
    out = jnp.einsum('oc,bcl->bol', w_c, a) + b_c[None, :, None]
    return out[:, :, 0]


if __name__ == "__main__":
    # module hyper-params (small, consistent with AttentionPool2d.__init__)
    spacial_dim = 4
    embed_dim = 32
    num_head_channels = 8
    output_dim = 32
    batch = 2
    num_heads = embed_dim // num_head_channels

    key = jax.random.PRNGKey(0)
    k0, k1, k2, k3, k4, k5 = jax.random.split(key, 6)

    x = jax.random.normal(
        k0, (batch, embed_dim, spacial_dim, spacial_dim), jnp.float32)
    # positional_embedding = randn(embed_dim, spacial_dim**2 + 1) / embed_dim**0.5
    pos_emb = jax.random.normal(
        k1, (embed_dim, spacial_dim ** 2 + 1), jnp.float32) / embed_dim ** 0.5
    # qkv_proj: Conv1d(embed_dim -> 3*embed_dim, kernel_size=1)  -> dense (3C, C)
    w_qkv = jax.random.normal(
        k2, (3 * embed_dim, embed_dim), jnp.float32) / math.sqrt(embed_dim)
    b_qkv = jax.random.normal(k3, (3 * embed_dim,), jnp.float32) * 0.01
    # c_proj: Conv1d(embed_dim -> output_dim, kernel_size=1)     -> dense (D, C)
    w_c = jax.random.normal(
        k4, (output_dim, embed_dim), jnp.float32) / math.sqrt(embed_dim)
    b_c = jax.random.normal(k5, (output_dim,), jnp.float32) * 0.01

    out = attention_pool_2d(x, pos_emb, w_qkv, b_qkv, w_c, b_c, num_heads)
    out = jax.block_until_ready(out)

    ref = _reference(x, pos_emb, w_qkv, b_qkv, w_c, b_c, num_heads)
    assert out.shape == (batch, output_dim), out.shape
    max_err = float(jnp.max(jnp.abs(out - ref)))
    assert jnp.allclose(out, ref, atol=1e-4, rtol=1e-4), max_err
    print("KERNEL_OK")
</pallas_src>

<mosaic_0001>
module attributes {stable_mosaic.version = 11 : i64} {
  func.func @_attention_pool_kernel(%arg0: i32, %arg1: memref<2x32x16xf32, #tpu.memory_space<vmem>>, %arg2: memref<1x32xf32, #tpu.memory_space<vmem>>, %arg3: memref<16x32xf32, #tpu.memory_space<vmem>>, %arg4: memref<32x32xf32, #tpu.memory_space<vmem>>, %arg5: memref<1x32xf32, #tpu.memory_space<vmem>>, %arg6: memref<32x32xf32, #tpu.memory_space<vmem>>, %arg7: memref<1x32xf32, #tpu.memory_space<vmem>>, %arg8: memref<32x32xf32, #tpu.memory_space<vmem>>, %arg9: memref<1x32xf32, #tpu.memory_space<vmem>>, %arg10: memref<32x32xf32, #tpu.memory_space<vmem>>, %arg11: memref<1x32xf32, #tpu.memory_space<vmem>>, %arg12: memref<32x4xf32, #tpu.memory_space<vmem>>, %arg13: memref<2x32xf32, #tpu.memory_space<vmem>>) attributes {dimension_semantics = [#tpu.dimension_semantics<parallel>], iteration_bounds = array<i64: 1>, scalar_prefetch = 0 : i64, scratch_operands = 0 : i64, tpu.core_type = #tpu.core_type<tc>, window_params = [{transform_indices = @transform_0, window_bounds = array<i64: 2, 32, 16>}, {pipeline_mode = #tpu.pipeline_mode<synchronous>, transform_indices = @transform_1, window_bounds = array<i64: 1, 32>}, {pipeline_mode = #tpu.pipeline_mode<synchronous>, transform_indices = @transform_2, window_bounds = array<i64: 16, 32>}, {pipeline_mode = #tpu.pipeline_mode<synchronous>, transform_indices = @transform_3, window_bounds = array<i64: 32, 32>}, {pipeline_mode = #tpu.pipeline_mode<synchronous>, transform_indices = @transform_4, window_bounds = array<i64: 1, 32>}, {pipeline_mode = #tpu.pipeline_mode<synchronous>, transform_indices = @transform_5, window_bounds = array<i64: 32, 32>}, {pipeline_mode = #tpu.pipeline_mode<synchronous>, transform_indices = @transform_6, window_bounds = array<i64: 1, 32>}, {pipeline_mode = #tpu.pipeline_mode<synchronous>, transform_indices = @transform_7, window_bounds = array<i64: 32, 32>}, {pipeline_mode = #tpu.pipeline_mode<synchronous>, transform_indices = @transform_8, window_bounds = array<i64: 1, 32>}, {pipeline_mode = #tpu.pipeline_mode<synchronous>, transform_indices = @transform_9, window_bounds = array<i64: 32, 32>}, {pipeline_mode = #tpu.pipeline_mode<synchronous>, transform_indices = @transform_10, window_bounds = array<i64: 1, 32>}, {pipeline_mode = #tpu.pipeline_mode<synchronous>, transform_indices = @transform_11, window_bounds = array<i64: 32, 4>}, {transform_indices = @transform_12, window_bounds = array<i64: 2, 32>}]} {
    %c0 = arith.constant 0 : index
    %c0_0 = arith.constant 0 : index
    %0 = vector.load %arg2[%c0, %c0_0] : memref<1x32xf32, #tpu.memory_space<vmem>>, vector<1x32xf32>
    %c0_1 = arith.constant 0 : index
    %c0_2 = arith.constant 0 : index
    %1 = vector.load %arg3[%c0_1, %c0_2] : memref<16x32xf32, #tpu.memory_space<vmem>>, vector<16x32xf32>
    %c0_3 = arith.constant 0 : index
    %c0_4 = arith.constant 0 : index
    %2 = vector.load %arg12[%c0_3, %c0_4] : memref<32x4xf32, #tpu.memory_space<vmem>>, vector<32x4xf32>
    %3 = tpu.transpose %2, [1, 0] : vector<32x4xf32> -> vector<4x32xf32>
    %c0_5 = arith.constant 0 : index
    %c0_6 = arith.constant 0 : index
    %4 = vector.load %arg4[%c0_5, %c0_6] : memref<32x32xf32, #tpu.memory_space<vmem>>, vector<32x32xf32>
    %c0_7 = arith.constant 0 : index
    %c0_8 = arith.constant 0 : index
    %5 = vector.load %arg6[%c0_7, %c0_8] : memref<32x32xf32, #tpu.memory_space<vmem>>, vector<32x32xf32>
    %c0_9 = arith.constant 0 : index
    %c0_10 = arith.constant 0 : index
    %6 = vector.load %arg8[%c0_9, %c0_10] : memref<32x32xf32, #tpu.memory_space<vmem>>, vector<32x32xf32>
    %c0_11 = arith.constant 0 : index
    %c0_12 = arith.constant 0 : index
    %7 = vector.load %arg10[%c0_11, %c0_12] : memref<32x32xf32, #tpu.memory_space<vmem>>, vector<32x32xf32>
    %c0_13 = arith.constant 0 : index
    %c0_14 = arith.constant 0 : index
    %8 = vector.load %arg5[%c0_13, %c0_14] : memref<1x32xf32, #tpu.memory_space<vmem>>, vector<1x32xf32>
    %c0_15 = arith.constant 0 : index
    %c0_16 = arith.constant 0 : index
    %9 = vector.load %arg7[%c0_15, %c0_16] : memref<1x32xf32, #tpu.memory_space<vmem>>, vector<1x32xf32>
    %c0_17 = arith.constant 0 : index
    %c0_18 = arith.constant 0 : index
    %10 = vector.load %arg9[%c0_17, %c0_18] : memref<1x32xf32, #tpu.memory_space<vmem>>, vector<1x32xf32>
    %c0_19 = arith.constant 0 : index
    %c0_20 = arith.constant 0 : index
    %11 = vector.load %arg11[%c0_19, %c0_20] : memref<1x32xf32, #tpu.memory_space<vmem>>, vector<1x32xf32>
    %c0_21 = arith.constant 0 : index
    %c0_22 = arith.constant 0 : index
    %c0_23 = arith.constant 0 : index
    %12 = vector.load %arg1[%c0_21, %c0_22, %c0_23] : memref<2x32x16xf32, #tpu.memory_space<vmem>>, vector<1x32x16xf32>
    %13 = vector.shape_cast %12 : vector<1x32x16xf32> to vector<32x16xf32>
    %14 = tpu.transpose %13, [1, 0] : vector<32x16xf32> -> vector<16x32xf32>
    %cst = arith.constant dense<0.000000e+00> : vector<32xf32>
    %15 = vector.multi_reduction <add>, %14, %cst [0] : vector<16x32xf32> to vector<32xf32>
    %16 = vector.shape_cast %15 : vector<32xf32> to vector<1x32xf32>
    %cst_24 = arith.constant 1.600000e+01 : f32
    %17 = vector.broadcast %cst_24 : f32 to vector<1x32xf32>
    %18 = arith.divf %16, %17 : vector<1x32xf32>
    %19 = arith.addf %18, %0 : vector<1x32xf32>
    %c1 = arith.constant 1 : index
    %c0_25 = arith.constant 0 : index
    %c0_26 = arith.constant 0 : index
    %20 = vector.load %arg1[%c1, %c0_25, %c0_26] : memref<2x32x16xf32, #tpu.memory_space<vmem>>, vector<1x32x16xf32>
    %21 = vector.shape_cast %20 : vector<1x32x16xf32> to vector<32x16xf32>
    %22 = tpu.transpose %21, [1, 0] : vector<32x16xf32> -> vector<16x32xf32>
    %cst_27 = arith.constant dense<0.000000e+00> : vector<32xf32>
    %23 = vector.multi_reduction <add>, %22, %cst_27 [0] : vector<16x32xf32> to vector<32xf32>
    %24 = vector.shape_cast %23 : vector<32xf32> to vector<1x32xf32>
    %cst_28 = arith.constant 1.600000e+01 : f32
    %25 = vector.broadcast %cst_28 : f32 to vector<1x32xf32>
    %26 = arith.divf %24, %25 : vector<1x32xf32>
    %27 = arith.addf %26, %0 : vector<1x32xf32>
    %28 = tpu.concatenate %19, %27 in 0 : vector<1x32xf32>, vector<1x32xf32> -> vector<2x32xf32>
    %cst_29 = arith.constant dense<0.000000e+00> : vector<2x32xf32>
    %29 = tpu.matmul %28, %4, %cst_29 {dimension_numbers = #tpu.dot_dimension_numbers<[1], [0], [0], [1], [0, 0, 1, 1], [], []>} : vector<2x32xf32>, vector<32x32xf32>, vector<2x32xf32> -> vector<2x32xf32>
    %30 = vector.broadcast %8 : vector<1x32xf32> to vector<2x32xf32>
    %31 = arith.addf %29, %30 : vector<2x32xf32>
    %cst_30 = arith.constant 0.353553385 : f32
    %32 = vector.broadcast %cst_30 : f32 to vector<2x32xf32>
    %33 = arith.mulf %31, %32 : vector<2x32xf32>
    %34 = arith.addf %14, %1 : vector<16x32xf32>
    %35 = tpu.concatenate %19, %34 in 0 : vector<1x32xf32>, vector<16x32xf32> -> vector<17x32xf32>
    %cst_31 = arith.constant dense<0.000000e+00> : vector<17x32xf32>
    %36 = tpu.matmul %35, %5, %cst_31 {dimension_numbers = #tpu.dot_dimension_numbers<[1], [0], [0], [1], [0, 0, 1, 1], [], []>} : vector<17x32xf32>, vector<32x32xf32>, vector<17x32xf32> -> vector<17x32xf32>
    %37 = vector.broadcast %9 : vector<1x32xf32> to vector<17x32xf32>
    %38 = arith.addf %36, %37 : vector<17x32xf32>
    %cst_32 = arith.constant dense<0.000000e+00> : vector<17x32xf32>
    %39 = tpu.matmul %35, %6, %cst_32 {dimension_numbers = #tpu.dot_dimension_numbers<[1], [0], [0], [1], [0, 0, 1, 1], [], []>} : vector<17x32xf32>, vector<32x32xf32>, vector<17x32xf32> -> vector<17x32xf32>
    %40 = vector.broadcast %10 : vector<1x32xf32> to vector<17x32xf32>
    %41 = arith.addf %39, %40 : vector<17x32xf32>
    %42 = vector.extract_strided_slice %33 {offsets = [0, 0], sizes = [1, 32], strides = [1, 1]} : vector<2x32xf32> to vector<1x32xf32>
    %43 = vector.broadcast %42 : vector<1x32xf32> to vector<17x32xf32>
    %44 = arith.mulf %43, %38 : vector<17x32xf32>
    %cst_33 = arith.constant dense<0.000000e+00> : vector<17x4xf32>
    %45 = tpu.matmul %44, %2, %cst_33 {dimension_numbers = #tpu.dot_dimension_numbers<[1], [0], [0], [1], [0, 0, 1, 1], [], []>} : vector<17x32xf32>, vector<32x4xf32>, vector<17x4xf32> -> vector<17x4xf32>
    %cst_34 = arith.constant dense<0xFF800000> : vector<4xf32>
    %46 = vector.multi_reduction <maximumf>, %45, %cst_34 [0] : vector<17x4xf32> to vector<4xf32>
    %47 = vector.shape_cast %46 : vector<4xf32> to vector<1x4xf32>
    %48 = vector.broadcast %47 : vector<1x4xf32> to vector<17x4xf32>
    %49 = arith.subf %45, %48 : vector<17x4xf32>
    %50 = math.exp %49 : vector<17x4xf32>
    %cst_35 = arith.constant dense<0.000000e+00> : vector<4xf32>
    %51 = vector.multi_reduction <add>, %50, %cst_35 [0] : vector<17x4xf32> to vector<4xf32>
    %52 = vector.shape_cast %51 : vector<4xf32> to vector<1x4xf32>
    %53 = tpu.reciprocal %52 : vector<1x4xf32> -> vector<1x4xf32>
    %54 = vector.broadcast %53 : vector<1x4xf32> to vector<17x4xf32>
    %55 = arith.mulf %50, %54 : vector<17x4xf32>
    %cst_36 = arith.constant dense<0.000000e+00> : vector<17x32xf32>
    %56 = tpu.matmul %55, %3, %cst_36 {dimension_numbers = #tpu.dot_dimension_numbers<[1], [0], [0], [1], [0, 0, 1, 1], [], []>} : vector<17x4xf32>, vector<4x32xf32>, vector<17x32xf32> -> vector<17x32xf32>
    %57 = arith.mulf %56, %41 : vector<17x32xf32>
    %cst_37 = arith.constant dense<0.000000e+00> : vector<32xf32>
    %58 = vector.multi_reduction <add>, %57, %cst_37 [0] : vector<17x32xf32> to vector<32xf32>
    %59 = vector.shape_cast %58 : vector<32xf32> to vector<1x32xf32>
    %60 = arith.addf %22, %1 : vector<16x32xf32>
    %61 = tpu.concatenate %27, %60 in 0 : vector<1x32xf32>, vector<16x32xf32> -> vector<17x32xf32>
    %cst_38 = arith.constant dense<0.000000e+00> : vector<17x32xf32>
    %62 = tpu.matmul %61, %5, %cst_38 {dimension_numbers = #tpu.dot_dimension_numbers<[1], [0], [0], [1], [0, 0, 1, 1], [], []>} : vector<17x32xf32>, vector<32x32xf32>, vector<17x32xf32> -> vector<17x32xf32>
    %63 = vector.broadcast %9 : vector<1x32xf32> to vector<17x32xf32>
    %64 = arith.addf %62, %63 : vector<17x32xf32>
    %cst_39 = arith.constant dense<0.000000e+00> : vector<17x32xf32>
    %65 = tpu.matmul %61, %6, %cst_39 {dimension_numbers = #tpu.dot_dimension_numbers<[1], [0], [0], [1], [0, 0, 1, 1], [], []>} : vector<17x32xf32>, vector<32x32xf32>, vector<17x32xf32> -> vector<17x32xf32>
    %66 = vector.broadcast %10 : vector<1x32xf32> to vector<17x32xf32>
    %67 = arith.addf %65, %66 : vector<17x32xf32>
    %68 = vector.extract_strided_slice %33 {offsets = [1, 0], sizes = [1, 32], strides = [1, 1]} : vector<2x32xf32> to vector<1x32xf32>
    %69 = vector.broadcast %68 : vector<1x32xf32> to vector<17x32xf32>
    %70 = arith.mulf %69, %64 : vector<17x32xf32>
    %cst_40 = arith.constant dense<0.000000e+00> : vector<17x4xf32>
    %71 = tpu.matmul %70, %2, %cst_40 {dimension_numbers = #tpu.dot_dimension_numbers<[1], [0], [0], [1], [0, 0, 1, 1], [], []>} : vector<17x32xf32>, vector<32x4xf32>, vector<17x4xf32> -> vector<17x4xf32>
    %cst_41 = arith.constant dense<0xFF800000> : vector<4xf32>
    %72 = vector.multi_reduction <maximumf>, %71, %cst_41 [0] : vector<17x4xf32> to vector<4xf32>
    %73 = vector.shape_cast %72 : vector<4xf32> to vector<1x4xf32>
    %74 = vector.broadcast %73 : vector<1x4xf32> to vector<17x4xf32>
    %75 = arith.subf %71, %74 : vector<17x4xf32>
    %76 = math.exp %75 : vector<17x4xf32>
    %cst_42 = arith.constant dense<0.000000e+00> : vector<4xf32>
    %77 = vector.multi_reduction <add>, %76, %cst_42 [0] : vector<17x4xf32> to vector<4xf32>
    %78 = vector.shape_cast %77 : vector<4xf32> to vector<1x4xf32>
    %79 = tpu.reciprocal %78 : vector<1x4xf32> -> vector<1x4xf32>
    %80 = vector.broadcast %79 : vector<1x4xf32> to vector<17x4xf32>
    %81 = arith.mulf %76, %80 : vector<17x4xf32>
    %cst_43 = arith.constant dense<0.000000e+00> : vector<17x32xf32>
    %82 = tpu.matmul %81, %3, %cst_43 {dimension_numbers = #tpu.dot_dimension_numbers<[1], [0], [0], [1], [0, 0, 1, 1], [], []>} : vector<17x4xf32>, vector<4x32xf32>, vector<17x32xf32> -> vector<17x32xf32>
    %83 = arith.mulf %82, %67 : vector<17x32xf32>
    %cst_44 = arith.constant dense<0.000000e+00> : vector<32xf32>
    %84 = vector.multi_reduction <add>, %83, %cst_44 [0] : vector<17x32xf32> to vector<32xf32>
    %85 = vector.shape_cast %84 : vector<32xf32> to vector<1x32xf32>
    %86 = tpu.concatenate %59, %85 in 0 : vector<1x32xf32>, vector<1x32xf32> -> vector<2x32xf32>
    %cst_45 = arith.constant dense<0.000000e+00> : vector<2x32xf32>
    %87 = tpu.matmul %86, %7, %cst_45 {dimension_numbers = #tpu.dot_dimension_numbers<[1], [0], [0], [1], [0, 0, 1, 1], [], []>} : vector<2x32xf32>, vector<32x32xf32>, vector<2x32xf32> -> vector<2x32xf32>
    %88 = vector.broadcast %11 : vector<1x32xf32> to vector<2x32xf32>
    %89 = arith.addf %87, %88 : vector<2x32xf32>
    %c0_46 = arith.constant 0 : index
    %c0_47 = arith.constant 0 : index
    %90 = vector.load %arg13[%c0_46, %c0_47] : memref<2x32xf32, #tpu.memory_space<vmem>>, vector<2x32xf32>
    tpu.vector_store %arg13[%c0_46, %c0_47], %89 {strides = array<i32>} : memref<2x32xf32, #tpu.memory_space<vmem>>, vector<2x32xf32>,
    return
  }
  func.func @transform_0(%arg0: i32) -> (i32, i32, i32) {
    %c0_i32 = arith.constant 0 : i32
    %c0_i32_0 = arith.constant 0 : i32
    %c0_i32_1 = arith.constant 0 : i32
    return %arg0, %c0_i32, %c0_i32_0 : i32, i32, i32
  }
  func.func @transform_1(%arg0: i32) -> (i32, i32) {
    %c0_i32 = arith.constant 0 : i32
    %c0_i32_0 = arith.constant 0 : i32
    %c0_i32_1 = arith.constant 0 : i32
    return %c0_i32, %c0_i32_0 : i32, i32
  }
  func.func @transform_2(%arg0: i32) -> (i32, i32) {
    %c0_i32 = arith.constant 0 : i32
    %c0_i32_0 = arith.constant 0 : i32
    %c0_i32_1 = arith.constant 0 : i32
    return %c0_i32, %c0_i32_0 : i32, i32
  }
  func.func @transform_3(%arg0: i32) -> (i32, i32) {
    %c0_i32 = arith.constant 0 : i32
    %c0_i32_0 = arith.constant 0 : i32
    %c0_i32_1 = arith.constant 0 : i32
    return %c0_i32, %c0_i32_0 : i32, i32
  }
  func.func @transform_4(%arg0: i32) -> (i32, i32) {
    %c0_i32 = arith.constant 0 : i32
    %c0_i32_0 = arith.constant 0 : i32
    %c0_i32_1 = arith.constant 0 : i32
    return %c0_i32, %c0_i32_0 : i32, i32
  }
  func.func @transform_5(%arg0: i32) -> (i32, i32) {
    %c0_i32 = arith.constant 0 : i32
    %c0_i32_0 = arith.constant 0 : i32
    %c0_i32_1 = arith.constant 0 : i32
    return %c0_i32, %c0_i32_0 : i32, i32
  }
  func.func @transform_6(%arg0: i32) -> (i32, i32) {
    %c0_i32 = arith.constant 0 : i32
    %c0_i32_0 = arith.constant 0 : i32
    %c0_i32_1 = arith.constant 0 : i32
    return %c0_i32, %c0_i32_0 : i32, i32
  }
  func.func @transform_7(%arg0: i32) -> (i32, i32) {
    %c0_i32 = arith.constant 0 : i32
    %c0_i32_0 = arith.constant 0 : i32
    %c0_i32_1 = arith.constant 0 : i32
    return %c0_i32, %c0_i32_0 : i32, i32
  }
  func.func @transform_8(%arg0: i32) -> (i32, i32) {
    %c0_i32 = arith.constant 0 : i32
    %c0_i32_0 = arith.constant 0 : i32
    %c0_i32_1 = arith.constant 0 : i32
    return %c0_i32, %c0_i32_0 : i32, i32
  }
  func.func @transform_9(%arg0: i32) -> (i32, i32) {
    %c0_i32 = arith.constant 0 : i32
    %c0_i32_0 = arith.constant 0 : i32
    %c0_i32_1 = arith.constant 0 : i32
    return %c0_i32, %c0_i32_0 : i32, i32
  }
  func.func @transform_10(%arg0: i32) -> (i32, i32) {
    %c0_i32 = arith.constant 0 : i32
    %c0_i32_0 = arith.constant 0 : i32
    %c0_i32_1 = arith.constant 0 : i32
    return %c0_i32, %c0_i32_0 : i32, i32
  }
  func.func @transform_11(%arg0: i32) -> (i32, i32) {
    %c0_i32 = arith.constant 0 : i32
    %c0_i32_0 = arith.constant 0 : i32
    %c0_i32_1 = arith.constant 0 : i32
    return %c0_i32, %c0_i32_0 : i32, i32
  }
  func.func @transform_12(%arg0: i32) -> (i32, i32) {
    %c0_i32 = arith.constant 0 : i32
    %c0_i32_0 = arith.constant 0 : i32
    return %arg0, %c0_i32 : i32, i32
  }
}

</mosaic_0001>

<llo_original>
// kernel: tpu_custom_call.1
$region0: #{tpu_custom_call.1}
  #allocation0 [shape = 'u32[]', space=smem, size = 0x4, offset = 0x4, fixed_abs, tag = 'smem constant byte address 0x4 - core index']
  #allocation1 [shape = 'u32[72,128]{1,0:T(1,128)}', space=vmem, size = 0x9000, scoped, tag = 'internal scratch']
  %s0 = inlined_call_operand.vmem [shape: f32[2,32,16], index: 0, kind: input, shape index: {}]
  %s1 = inlined_call_operand.vmem [shape: f32[1,32], index: 1, kind: input, shape index: {}]
  %s2 = inlined_call_operand.hbm [shape: f32[16,32], index: 2, kind: input, shape index: {}]
  %s3 = inlined_call_operand.vmem [shape: f32[32,32], index: 3, kind: input, shape index: {}]
  %s4 = inlined_call_operand.vmem [shape: f32[1,32], index: 4, kind: input, shape index: {}]
  %s5 = inlined_call_operand.vmem [shape: f32[32,32], index: 5, kind: input, shape index: {}]
  %s6 = inlined_call_operand.vmem [shape: f32[1,32], index: 6, kind: input, shape index: {}]
  %s7 = inlined_call_operand.vmem [shape: f32[32,32], index: 7, kind: input, shape index: {}]
  %s8 = inlined_call_operand.vmem [shape: f32[1,32], index: 8, kind: input, shape index: {}]
  %s9 = inlined_call_operand.hbm [shape: f32[32,32], index: 9, kind: input, shape index: {}]
  %s10 = inlined_call_operand.vmem [shape: f32[1,32], index: 10, kind: input, shape index: {}]
  %s11 = inlined_call_operand.vmem [shape: f32[32,4], index: 11, kind: input, shape index: {}]
  %s12 = inlined_call_operand.hbm [shape: f32[2,32], index: 12, kind: output, shape index: {}]
  %s13 = sld [smem:[#allocation0]]
  $region66: #{tpu_custom_call.1} parent=0
    _
  %s15 = ssub.s32 1, %s13
  %s16 = scalar_select 0, %s15, %s13
  $region1: #{tpu_custom_call.1} parent=0
    #allocation2 [shape = 'u8[8192]{0}', space=vmem, size = 0x2000, scoped, tag = 'input window, operand 2, single buffered']
    #allocation3 [shape = 's32[1]{0}', space=sflag, size = 0x4, scoped, tag = 'scoped memory for tpu_custom_call.1']
    #allocation4 [shape = 's32[1]{0}', space=sflag, size = 0x4, scoped, tag = 'scoped memory for tpu_custom_call.1']
    #allocation5 [shape = 'u8[16384]{0}', space=vmem, size = 0x4000, scoped, tag = 'input window, operand 9, single buffered']
    #allocation6 [shape = 's32[1]{0}', space=sflag, size = 0x4, scoped, tag = 'scoped memory for tpu_custom_call.1']
    #allocation7 [shape = 'u8[1024]{0}', space=vmem, size = 0x400, scoped, tag = 'output window, operand 0, single buffered']
    %17 = vsyncpa [#allocation3], 0
    %18 = vsyncpa [#allocation6], 0
    %19 = vsyncpa [#allocation4], 0
    // Predicated region
    $region2: #{tpu_custom_call.1} parent=1 // pred_check
      _
    $region3: #{tpu_custom_call.1} parent=1 // pred_check_branch
      %21 = sbr.rel (0) target = $region5
    $region4: #{tpu_custom_call.1} parent=1 // pred_region
      _
    $region5: #{tpu_custom_call.1} parent=1 // pred_fallthru
      _
    // Predicated region
    $region6: #{tpu_custom_call.1} parent=1 // pred_check
      _
    $region7: #{tpu_custom_call.1} parent=1 // pred_check_branch
      %23 = sbr.rel (0) target = $region9
    $region8: #{tpu_custom_call.1} parent=1 // pred_region
      _
    $region9: #{tpu_custom_call.1} parent=1 // pred_fallthru
      _
    // Predicated region
    $region10: #{tpu_custom_call.1} parent=1 // pred_check
      _
    $region11: #{tpu_custom_call.1} parent=1 // pred_check_branch
      %25 = sbr.rel (0) target = $region13
    $region12: #{tpu_custom_call.1} parent=1 // pred_region
      %27 = vsyncadd [#allocation3], 0
      %s28 = sshll.u32 %s2, 4
      %s29 = int_to_ptr.hbm [resolvable:$true] %s28
      %s30 = sshll.u32 [#allocation2], 4
      %s31 = int_to_ptr.vmem [resolvable:$true] %s30
      %36 = dma.hbm_to_vmem [thread:$0]  %s29, 256, %s31, [#allocation3], 128, 128, 8
    $region13: #{tpu_custom_call.1} parent=1 // pred_fallthru
      _
    // Predicated region
    $region14: #{tpu_custom_call.1} parent=1 // pred_check
      _
    $region15: #{tpu_custom_call.1} parent=1 // pred_check_branch
      %38 = sbr.rel (0) target = $region17
    $region16: #{tpu_custom_call.1} parent=1 // pred_region
      _
    $region17: #{tpu_custom_call.1} parent=1 // pred_fallthru
      _
    // Predicated region
    $region18: #{tpu_custom_call.1} parent=1 // pred_check
      _
    $region19: #{tpu_custom_call.1} parent=1 // pred_check_branch
      %40 = sbr.rel (0) target = $region21
    $region20: #{tpu_custom_call.1} parent=1 // pred_region
      _
    $region21: #{tpu_custom_call.1} parent=1 // pred_fallthru
      _
    // Predicated region
    $region22: #{tpu_custom_call.1} parent=1 // pred_check
      _
    $region23: #{tpu_custom_call.1} parent=1 // pred_check_branch
      %42 = sbr.rel (0) target = $region25
    $region24: #{tpu_custom_call.1} parent=1 // pred_region
      _
    $region25: #{tpu_custom_call.1} parent=1 // pred_fallthru
      _
    // Predicated region
    $region26: #{tpu_custom_call.1} parent=1 // pred_check
      _
    $region27: #{tpu_custom_call.1} parent=1 // pred_check_branch
      %44 = sbr.rel (0) target = $region29
    $region28: #{tpu_custom_call.1} parent=1 // pred_region
      _
    $region29: #{tpu_custom_call.1} parent=1 // pred_fallthru
      _
    // Predicated region
    $region30: #{tpu_custom_call.1} parent=1 // pred_check
      _
    $region31: #{tpu_custom_call.1} parent=1 // pred_check_branch
      %46 = sbr.rel (0) target = $region33
    $region32: #{tpu_custom_call.1} parent=1 // pred_region
      _
    $region33: #{tpu_custom_call.1} parent=1 // pred_fallthru
      _
    // Predicated region
    $region34: #{tpu_custom_call.1} parent=1 // pred_check
      _
    $region35: #{tpu_custom_call.1} parent=1 // pred_check_branch
      %48 = sbr.rel (0) target = $region37
    $region36: #{tpu_custom_call.1} parent=1 // pred_region
      _
    $region37: #{tpu_custom_call.1} parent=1 // pred_fallthru
      _
    // Predicated region
    $region38: #{tpu_custom_call.1} parent=1 // pred_check
      _
    $region39: #{tpu_custom_call.1} parent=1 // pred_check_branch
      %50 = sbr.rel (0) target = $region41
    $region40: #{tpu_custom_call.1} parent=1 // pred_region
      %52 = vsyncadd [#allocation6], 0
      %s53 = sshll.u32 %s9, 4
      %s54 = int_to_ptr.hbm [resolvable:$true] %s53
      %s55 = sshll.u32 [#allocation5], 4
      %s56 = int_to_ptr.vmem [resolvable:$true] %s55
      %61 = dma.hbm_to_vmem [thread:$0]  %s54, 512, %s56, [#allocation6], 128, 128, 8
    $region41: #{tpu_custom_call.1} parent=1 // pred_fallthru
      _
    // Predicated region
    $region42: #{tpu_custom_call.1} parent=1 // pred_check
      _
    $region43: #{tpu_custom_call.1} parent=1 // pred_check_branch
      %63 = sbr.rel (0) target = $region45
    $region44: #{tpu_custom_call.1} parent=1 // pred_region
      _
    $region45: #{tpu_custom_call.1} parent=1 // pred_fallthru
      _
    // Predicated region
    $region46: #{tpu_custom_call.1} parent=1 // pred_check
      _
    $region47: #{tpu_custom_call.1} parent=1 // pred_check_branch
      %65 = sbr.rel (0) target = $region49
    $region48: #{tpu_custom_call.1} parent=1 // pred_region
      _
    $region49: #{tpu_custom_call.1} parent=1 // pred_fallthru
      _
    // Predicated region
    $region50: #{tpu_custom_call.1} parent=1 // pred_check
      _
    $region51: #{tpu_custom_call.1} parent=1 // pred_check_branch
      %67 = sbr.rel (0) target = $region53
    $region52: #{tpu_custom_call.1} parent=1 // pred_region
      %69 = dma.done [#allocation3], 256
    $region53: #{tpu_custom_call.1} parent=1 // pred_fallthru
      _
    // Predicated region
    $region54: #{tpu_custom_call.1} parent=1 // pred_check
      _
    $region55: #{tpu_custom_call.1} parent=1 // pred_check_branch
      %71 = sbr.rel (0) target = $region57
    $region56: #{tpu_custom_call.1} parent=1 // pred_region
      %73 = dma.done [#allocation6], 512
    $region57: #{tpu_custom_call.1} parent=1 // pred_fallthru
      _
    %v74 = vld [vmem:[%s1] sm:$0x1]
    %v75 = vld [vmem:[#allocation2] sm:$0xff]
    %v76 = vld [vmem:[#allocation2 + $0x8] sm:$0xff]
    %v77 = vld [vmem:[%s11] sm:$0xff]
    %v78 = vld [vmem:[%s11 + $0x8] sm:$0xff]
    %v79 = vld [vmem:[%s11 + $0x10] sm:$0xff]
    %v80 = vld [vmem:[%s11 + $0x18] sm:$0xff]
    %v81 = vld [vmem:[%s3] sm:$0xff]
    %v82 = vld [vmem:[%s3 + $0x8] sm:$0xff]
    %v83 = vld [vmem:[%s3 + $0x10] sm:$0xff]
    %v84 = vld [vmem:[%s3 + $0x18] sm:$0xff]
    %v85 = vld [vmem:[%s5] sm:$0xff]
    %v86 = vld [vmem:[%s5 + $0x8] sm:$0xff]
    %v87 = vld [vmem:[%s5 + $0x10] sm:$0xff]
    %v88 = vld [vmem:[%s5 + $0x18] sm:$0xff]
    %v89 = vld [vmem:[%s7] sm:$0xff]
    %v90 = vld [vmem:[%s7 + $0x8] sm:$0xff]
    %v91 = vld [vmem:[%s7 + $0x10] sm:$0xff]
    %v92 = vld [vmem:[%s7 + $0x18] sm:$0xff]
    %v93 = vld [vmem:[#allocation5] sm:$0xff]
    %v94 = vld [vmem:[#allocation5 + $0x8] sm:$0xff]
    %v95 = vld [vmem:[#allocation5 + $0x10] sm:$0xff]
    %v96 = vld [vmem:[#allocation5 + $0x18] sm:$0xff]
    %v97 = vld [vmem:[%s4] sm:$0x1]
    %v98 = vld [vmem:[%s6] sm:$0x1]
    %v99 = vld [vmem:[%s8] sm:$0x1]
    %v100 = vld [vmem:[%s10] sm:$0x1]
    %v101 = vld [vmem:[%s0] sm:$0xff]
    %v102 = vld [vmem:[%s0 + $0x8] sm:$0xff]
    %v103 = vld [vmem:[%s0 + $0x10] sm:$0xff]
    %v104 = vld [vmem:[%s0 + $0x18] sm:$0xff]
    %105 = vxpose.xlu0.b32.start [1/16] %v101, 128
    %106 = vxpose.xlu0.b32.cont [2/16] %v102, 128
    %107 = vxpose.xlu0.b32.cont [3/16] %v103, 128
    %108 = vxpose.xlu0.b32.cont [4/16] %v104, 128
    %109 = vxpose.xlu0.b32.cont [5/16] 0.0, 128
    %110 = vxpose.xlu0.b32.cont [6/16] 0.0, 128
    %111 = vxpose.xlu0.b32.cont [7/16] 0.0, 128
    %112 = vxpose.xlu0.b32.cont [8/16] 0.0, 128
    %113 = vxpose.xlu0.b32.cont [9/16] 0.0, 128
    %114 = vxpose.xlu0.b32.cont [10/16] 0.0, 128
    %115 = vxpose.xlu0.b32.cont [11/16] 0.0, 128
    %116 = vxpose.xlu0.b32.cont [12/16] 0.0, 128
    %117 = vxpose.xlu0.b32.cont [13/16] 0.0, 128
    %118 = vxpose.xlu0.b32.cont [14/16] 0.0, 128
    %119 = vxpose.xlu0.b32.cont [15/16] 0.0, 128
    %120 = vxpose.xlu0.b32.end [16/16] 0.0, 128
    %v121 = vpop.trf.xlu0
    %v122 = vpop.trf.xlu0
    %v123 = vpop.trf.xlu0
    %v124 = vpop.trf.xlu0
    %v125 = vpop.trf.xlu0
    %v126 = vpop.trf.xlu0
    %v127 = vpop.trf.xlu0
    %v128 = vpop.trf.xlu0
    %v129 = vpop.trf.xlu0
    %v130 = vpop.trf.xlu0
    %v131 = vpop.trf.xlu0
    %v132 = vpop.trf.xlu0
    %v133 = vpop.trf.xlu0
    %v134 = vpop.trf.xlu0
    %v135 = vpop.trf.xlu0
    %v136 = vpop.trf.xlu0
    %vm137 = vcmask 261120
    %v138 = vsel %vm137, %v121, 0.0
    %v139 = vsel %vm137, %v122, 0.0
    %v140 = vadd.f32 %v138, %v139
    %v141 = vrot.slane %v140, 4
    %v142 = vadd.f32 %v140, %v141
    %v143 = vrot.slane %v142, 2
    %v144 = vadd.f32 %v142, %v143
    %v145 = vrot.slane %v144, 1
    %v146 = vadd.f32 %v144, %v145
    %v147 = vrcp.pop 16.0
    %v148 = vmul.f32 16.0, %v147
    %v149 = vsub.f32 1.0, %v148
    %v150 = vmul.f32 %v147, %v149
    %v151 = vadd.f32 %v147, %v150
    %vm152 = vweird.f32 %v147
    %v153 = vsel %vm152, %v147, %v151
    %v154 = vmul.f32 %v146, %v153
    %v155 = vadd.f32 %v154, %v74
    %s156 = scalar_lea.vmem %s0, 32
    %v157 = vld [vmem:[%s156] sm:$0xff]
    %v158 = vld [vmem:[%s156 + $0x8] sm:$0xff]
    %v159 = vld [vmem:[%s156 + $0x10] sm:$0xff]
    %v160 = vld [vmem:[%s156 + $0x18] sm:$0xff]
    %161 = vxpose.xlu0.b32.start [1/16] %v157, 128
    %162 = vxpose.xlu0.b32.cont [2/16] %v158, 128
    %163 = vxpose.xlu0.b32.cont [3/16] %v159, 128
    %164 = vxpose.xlu0.b32.cont [4/16] %v160, 128
    %165 = vxpose.xlu0.b32.cont [5/16] 0.0, 128
    %166 = vxpose.xlu0.b32.cont [6/16] 0.0, 128
    %167 = vxpose.xlu0.b32.cont [7/16] 0.0, 128
    %168 = vxpose.xlu0.b32.cont [8/16] 0.0, 128
    %169 = vxpose.xlu0.b32.cont [9/16] 0.0, 128
    %170 = vxpose.xlu0.b32.cont [10/16] 0.0, 128
    %171 = vxpose.xlu0.b32.cont [11/16] 0.0, 128
    %172 = vxpose.xlu0.b32.cont [12/16] 0.0, 128
    %173 = vxpose.xlu0.b32.cont [13/16] 0.0, 128
    %174 = vxpose.xlu0.b32.cont [14/16] 0.0, 128
    %175 = vxpose.xlu0.b32.cont [15/16] 0.0, 128
    %176 = vxpose.xlu0.b32.end [16/16] 0.0, 128
    %v177 = vpop.trf.xlu0
    %v178 = vpop.trf.xlu0
    %v179 = vpop.trf.xlu0
    %v180 = vpop.trf.xlu0
    %v181 = vpop.trf.xlu0
    %v182 = vpop.trf.xlu0
    %v183 = vpop.trf.xlu0
    %v184 = vpop.trf.xlu0
    %v185 = vpop.trf.xlu0
    %v186 = vpop.trf.xlu0
    %v187 = vpop.trf.xlu0
    %v188 = vpop.trf.xlu0
    %v189 = vpop.trf.xlu0
    %v190 = vpop.trf.xlu0
    %v191 = vpop.trf.xlu0
    %v192 = vpop.trf.xlu0
    %v193 = vsel %vm137, %v177, 0.0
    %v194 = vsel %vm137, %v178, 0.0
    %v195 = vadd.f32 %v193, %v194
    %v196 = vrot.slane %v195, 4
    %v197 = vadd.f32 %v195, %v196
    %v198 = vrot.slane %v197, 2
    %v199 = vadd.f32 %v197, %v198
    %v200 = vrot.slane %v199, 1
    %v201 = vadd.f32 %v199, %v200
    %v202 = vmul.f32 %v201, %v153
    %v203 = vadd.f32 %v202, %v74
    %v205 = vrot.slane %v203, 7
    %vm207 = vcmask 1040384
    %v208 = vsel %vm207, %v155, %v205
    %v210 = vperm.slane %v97, 0
    %v213 = vsel %vm137, %v208, 0
    %215 = vmatpush.msra.mxu0 0.0
    %216 = vmatpush.msra.mxu0 0.0
    %217 = vmatpush.msra.mxu0 0.0
    %218 = vmatpush.msra.mxu0 0.0
    %219 = vmatpush.msra.mxu0 0.0
    %220 = vmatpush.msra.mxu0 0.0
    %221 = vmatpush.msra.mxu0 0.0
    %222 = vmatpush.msra.mxu0 0.0
    %223 = vmatpush.msra.mxu0 0.0
    %224 = vmatpush.msra.mxu0 0.0
    %225 = vmatpush.msra.mxu0 0.0
    %226 = vmatpush.msra.mxu0 0.0
    %227 = vmatpush.msra.mxu0 %v84
    %228 = vmatpush.msra.mxu0 %v83
    %229 = vmatpush.msra.mxu0 %v82
    %230 = vmatpush.msra.mxu0 %v81
    %231 = vmatmul.f32.gmra.mxu0 %v213
    %v232 = vpop.f32.mrf.mxu0
    %v233 = vadd.f32 %v210, %v232
    %234 = vdwg.mxu0
    %v235 = vmul.f32 %v233, 0.35355338
    %v236 = vadd.f32 %v121, %v75
    %v237 = vadd.f32 %v122, %v76
    %v240 = vrot.slane %v236, 7
    %v241 = vrot.slane %v237, 7
    %v242 = vsel %vm207, %v240, %v241
    %v244 = vsel %vm207, %v155, %v240
    %v246 = vperm.slane %v98, 0
    %v249 = vsel %vm137, %v244, 0
    %v251 = vsel %vm137, %v242, 0
    %v253 = vsel %vm137, %v241, 0
    %255 = vmatpush.msra.mxu0 0.0
    %256 = vmatpush.msra.mxu0 0.0
    %257 = vmatpush.msra.mxu0 0.0
    %258 = vmatpush.msra.mxu0 0.0
    %259 = vmatpush.msra.mxu0 0.0
    %260 = vmatpush.msra.mxu0 0.0
    %261 = vmatpush.msra.mxu0 0.0
    %262 = vmatpush.msra.mxu0 0.0
    %263 = vmatpush.msra.mxu0 0.0
    %264 = vmatpush.msra.mxu0 0.0
    %265 = vmatpush.msra.mxu0 0.0
    %266 = vmatpush.msra.mxu0 0.0
    %267 = vmatpush.msra.mxu0 %v88
    %268 = vmatpush.msra.mxu0 %v87
    %269 = vmatpush.msra.mxu0 %v86
    %270 = vmatpush.msra.mxu0 %v85
    %271 = vmatmul.f32.gmra.mxu0 %v249
    %v272 = vpop.f32.mrf.mxu0
    %v273 = vadd.f32 %v246, %v272
    %274 = vmatmul.f32.gmra.mxu0 %v251
    %v275 = vpop.f32.mrf.mxu0
    %v276 = vadd.f32 %v246, %v275
    %277 = vmatmul.f32.gmra.mxu0 %v253
    %v278 = vpop.f32.mrf.mxu0
    %v279 = vadd.f32 %v246, %v278
    %280 = vdwg.mxu0
    %v282 = vperm.slane %v99, 0
    %284 = vmatpush.msra.mxu0 0.0
    %285 = vmatpush.msra.mxu0 0.0
    %286 = vmatpush.msra.mxu0 0.0
    %287 = vmatpush.msra.mxu0 0.0
    %288 = vmatpush.msra.mxu0 0.0
    %289 = vmatpush.msra.mxu0 0.0
    %290 = vmatpush.msra.mxu0 0.0
    %291 = vmatpush.msra.mxu0 0.0
    %292 = vmatpush.msra.mxu0 0.0
    %293 = vmatpush.msra.mxu0 0.0
    %294 = vmatpush.msra.mxu0 0.0
    %295 = vmatpush.msra.mxu0 0.0
    %296 = vmatpush.msra.mxu0 %v92
    %297 = vmatpush.msra.mxu0 %v91
    %298 = vmatpush.msra.mxu0 %v90
    %299 = vmatpush.msra.mxu0 %v89
    %300 = vmatmul.f32.gmra.mxu0 %v249
    %v301 = vpop.f32.mrf.mxu0
    %v302 = vadd.f32 %v282, %v301
    %303 = vmatmul.f32.gmra.mxu0 %v251
    %v304 = vpop.f32.mrf.mxu0
    %v305 = vadd.f32 %v282, %v304
    %306 = vmatmul.f32.gmra.mxu0 %v253
    %v307 = vpop.f32.mrf.mxu0
    %v308 = vadd.f32 %v282, %v307
    %309 = vdwg.mxu0
    %v310 = vperm.slane %v235, 0
    %v311 = vmul.f32 %v310, %v273
    %v312 = vmul.f32 %v310, %v276
    %v313 = vmul.f32 %v310, %v279
    %v315 = vsel %vm137, %v311, 0
    %v318 = vsel %vm137, %v312, 0
    %v321 = vsel %vm137, %v313, 0
    %323 = vmatpush.msra.mxu0 0.0
    %324 = vmatpush.msra.mxu0 0.0
    %325 = vmatpush.msra.mxu0 0.0
    %326 = vmatpush.msra.mxu0 0.0
    %327 = vmatpush.msra.mxu0 0.0
    %328 = vmatpush.msra.mxu0 0.0
    %329 = vmatpush.msra.mxu0 0.0
    %330 = vmatpush.msra.mxu0 0.0
    %331 = vmatpush.msra.mxu0 0.0
    %332 = vmatpush.msra.mxu0 0.0
    %333 = vmatpush.msra.mxu0 0.0
    %334 = vmatpush.msra.mxu0 0.0
    %335 = vmatpush.msra.mxu0 %v80
    %336 = vmatpush.msra.mxu0 %v79
    %337 = vmatpush.msra.mxu0 %v78
    %338 = vmatpush.msra.mxu0 %v77
    %339 = vmatmul.f32.gmra.mxu0 %v315
    %v340 = vpop.f32.mrf.mxu0
    %v341 = vadd.f32 0.0, %v340
    %342 = vmatmul.f32.gmra.mxu0 %v318
    %v343 = vpop.f32.mrf.mxu0
    %v344 = vadd.f32 0.0, %v343
    %345 = vmatmul.f32.gmra.mxu0 %v321
    %v346 = vpop.f32.mrf.mxu0
    %v347 = vadd.f32 0.0, %v346
    %348 = vdwg.mxu0
    %vm349 = vcmask 31744
    %v350 = vsel %vm349, %v341, -inf
    %v351 = vsel %vm349, %v344, -inf
    %vm352 = vcmask 24576
    %v353 = vsel %vm352, %v347, -inf
    %v354 = vmax.f32 %v350, %v351
    %v355 = vmax.f32 %v354, %v353
    %v356 = vrot.slane %v355, 4
    %v357 = vmax.f32 %v355, %v356
    %v358 = vrot.slane %v357, 2
    %v359 = vmax.f32 %v357, %v358
    %v360 = vrot.slane %v359, 1
    %v361 = vmax.f32 %v359, %v360
    %v362 = vsub.f32 %v341, %v361
    %v363 = vsub.f32 %v344, %v361
    %v364 = vsub.f32 %v347, %v361
    %v365 = vmul.f32 %v362, 1.442695
    %v366 = vpow.pop %v365
    %v367 = vmul.f32 %v363, 1.442695
    %v368 = vpow.pop %v367
    %v369 = vmul.f32 %v364, 1.442695
    %v370 = vpow.pop %v369
    %v371 = vsel %vm349, %v366, 0.0
    %v372 = vsel %vm349, %v368, 0.0
    %v373 = vadd.f32 %v371, %v372
    %v374 = vsel %vm352, %v370, 0.0
    %v375 = vadd.f32 %v373, %v374
    %v376 = vrot.slane %v375, 4
    %v377 = vadd.f32 %v375, %v376
    %v378 = vrot.slane %v377, 2
    %v379 = vadd.f32 %v377, %v378
    %v380 = vrot.slane %v379, 1
    %v381 = vadd.f32 %v379, %v380
    %v382 = vrcp.pop %v381
    %v383 = vmul.f32 %v381, %v382
    %v384 = vsub.f32 1.0, %v383
    %v385 = vmul.f32 %v382, %v384
    %v386 = vadd.f32 %v382, %v385
    %vm387 = vweird.f32 %v381
    %vm388 = vweird.f32 %v382
    %vm389 = vmor %vm387, %vm388
    %v390 = vsel %vm389, %v382, %v386
    %v391 = vand.u32 2147483647, %v381
    %vm392 = vcmp.eq.f32.partialorder %v391, 8.507059e+37
    %v393 = vand.u32 %v381, 2147483648
    %v394 = vor.u32 1.1754944e-38, %v393
    %v395 = vsel %vm392, %v394, %v390
    %v396 = vmul.f32 %v366, %v395
    %v397 = vmul.f32 %v368, %v395
    %v398 = vmul.f32 %v370, %v395
    %v400 = vsel %vm349, %v396, 0
    %v403 = vsel %vm349, %v397, 0
    %v406 = vsel %vm349, %v398, 0
    %v409 = vsel %vm349, %v77, 0
    %v412 = vsel %vm349, %v78, 0
    %v415 = vsel %vm349, %v79, 0
    %v418 = vsel %vm349, %v80, 0
    %420 = vmatpush.xpose.msra.mxu0 0.0
    %421 = vmatpush.xpose.msra.mxu0 0.0
    %422 = vmatpush.xpose.msra.mxu0 0.0
    %423 = vmatpush.xpose.msra.mxu0 0.0
    %424 = vmatpush.xpose.msra.mxu0 0.0
    %425 = vmatpush.xpose.msra.mxu0 0.0
    %426 = vmatpush.xpose.msra.mxu0 0.0
    %427 = vmatpush.xpose.msra.mxu0 0.0
    %428 = vmatpush.xpose.msra.mxu0 0.0
    %429 = vmatpush.xpose.msra.mxu0 0.0
    %430 = vmatpush.xpose.msra.mxu0 0.0
    %431 = vmatpush.xpose.msra.mxu0 0.0
    %432 = vmatpush.xpose.msra.mxu0 %v418
    %433 = vmatpush.xpose.msra.mxu0 %v415
    %434 = vmatpush.xpose.msra.mxu0 %v412
    %435 = vmatpush.xpose.msra.mxu0 %v409
    %436 = vmatmul.f32.gmra.mxu0 %v400
    %v437 = vpop.f32.mrf.mxu0
    %v438 = vadd.f32 0.0, %v437
    %439 = vmatmul.f32.gmra.mxu0 %v403
    %v440 = vpop.f32.mrf.mxu0
    %v441 = vadd.f32 0.0, %v440
    %442 = vmatmul.f32.gmra.mxu0 %v406
    %v443 = vpop.f32.mrf.mxu0
    %v444 = vadd.f32 0.0, %v443
    %445 = vdwg.mxu0
    %v446 = vmul.f32 %v438, %v302
    %v447 = vmul.f32 %v441, %v305
    %v448 = vmul.f32 %v444, %v308
    %v449 = vsel %vm137, %v446, 0.0
    %v450 = vsel %vm137, %v447, 0.0
    %v451 = vadd.f32 %v449, %v450
    %vm452 = vcmask 253952
    %v453 = vsel %vm452, %v448, 0.0
    %v454 = vadd.f32 %v451, %v453
    %v455 = vrot.slane %v454, 4
    %v456 = vadd.f32 %v454, %v455
    %v457 = vrot.slane %v456, 2
    %v458 = vadd.f32 %v456, %v457
    %v459 = vrot.slane %v458, 1
    %v460 = vadd.f32 %v458, %v459
    %v461 = vadd.f32 %v177, %v75
    %v462 = vadd.f32 %v178, %v76
    %v465 = vrot.slane %v461, 7
    %v466 = vrot.slane %v462, 7
    %v467 = vsel %vm207, %v465, %v466
    %v469 = vsel %vm207, %v203, %v465
    %v471 = vsel %vm137, %v469, 0
    %v473 = vsel %vm137, %v467, 0
    %v475 = vsel %vm137, %v466, 0
    %477 = vmatpush.msra.mxu0 0.0
    %478 = vmatpush.msra.mxu0 0.0
    %479 = vmatpush.msra.mxu0 0.0
    %480 = vmatpush.msra.mxu0 0.0
    %481 = vmatpush.msra.mxu0 0.0
    %482 = vmatpush.msra.mxu0 0.0
    %483 = vmatpush.msra.mxu0 0.0
    %484 = vmatpush.msra.mxu0 0.0
    %485 = vmatpush.msra.mxu0 0.0
    %486 = vmatpush.msra.mxu0 0.0
    %487 = vmatpush.msra.mxu0 0.0
    %488 = vmatpush.msra.mxu0 0.0
    %489 = vmatpush.msra.mxu0 %v88
    %490 = vmatpush.msra.mxu0 %v87
    %491 = vmatpush.msra.mxu0 %v86
    %492 = vmatpush.msra.mxu0 %v85
    %493 = vmatmul.f32.gmra.mxu0 %v471
    %v494 = vpop.f32.mrf.mxu0
    %v495 = vadd.f32 %v246, %v494
    %496 = vmatmul.f32.gmra.mxu0 %v473
    %v497 = vpop.f32.mrf.mxu0
    %v498 = vadd.f32 %v246, %v497
    %499 = vmatmul.f32.gmra.mxu0 %v475
    %v500 = vpop.f32.mrf.mxu0
    %v501 = vadd.f32 %v246, %v500
    %502 = vdwg.mxu0
    %503 = vmatpush.msra.mxu0 0.0
    %504 = vmatpush.msra.mxu0 0.0
    %505 = vmatpush.msra.mxu0 0.0
    %506 = vmatpush.msra.mxu0 0.0
    %507 = vmatpush.msra.mxu0 0.0
    %508 = vmatpush.msra.mxu0 0.0
    %509 = vmatpush.msra.mxu0 0.0
    %510 = vmatpush.msra.mxu0 0.0
    %511 = vmatpush.msra.mxu0 0.0
    %512 = vmatpush.msra.mxu0 0.0
    %513 = vmatpush.msra.mxu0 0.0
    %514 = vmatpush.msra.mxu0 0.0
    %515 = vmatpush.msra.mxu0 %v92
    %516 = vmatpush.msra.mxu0 %v91
    %517 = vmatpush.msra.mxu0 %v90
    %518 = vmatpush.msra.mxu0 %v89
    %519 = vmatmul.f32.gmra.mxu0 %v471
    %v520 = vpop.f32.mrf.mxu0
    %v521 = vadd.f32 %v282, %v520
    %522 = vmatmul.f32.gmra.mxu0 %v473
    %v523 = vpop.f32.mrf.mxu0
    %v524 = vadd.f32 %v282, %v523
    %525 = vmatmul.f32.gmra.mxu0 %v475
    %v526 = vpop.f32.mrf.mxu0
    %v527 = vadd.f32 %v282, %v526
    %528 = vdwg.mxu0
    %v529 = vperm.slane %v235, 1
    %v530 = vmul.f32 %v529, %v495
    %v531 = vmul.f32 %v529, %v498
    %v532 = vmul.f32 %v529, %v501
    %v534 = vsel %vm137, %v530, 0
    %v537 = vsel %vm137, %v531, 0
    %v540 = vsel %vm137, %v532, 0
    %542 = vmatpush.msra.mxu0 0.0
    %543 = vmatpush.msra.mxu0 0.0
    %544 = vmatpush.msra.mxu0 0.0
    %545 = vmatpush.msra.mxu0 0.0
    %546 = vmatpush.msra.mxu0 0.0
    %547 = vmatpush.msra.mxu0 0.0
    %548 = vmatpush.msra.mxu0 0.0
    %549 = vmatpush.msra.mxu0 0.0
    %550 = vmatpush.msra.mxu0 0.0
    %551 = vmatpush.msra.mxu0 0.0
    %552 = vmatpush.msra.mxu0 0.0
    %553 = vmatpush.msra.mxu0 0.0
    %554 = vmatpush.msra.mxu0 %v80
    %555 = vmatpush.msra.mxu0 %v79
    %556 = vmatpush.msra.mxu0 %v78
    %557 = vmatpush.msra.mxu0 %v77
    %558 = vmatmul.f32.gmra.mxu0 %v534
    %v559 = vpop.f32.mrf.mxu0
    %v560 = vadd.f32 0.0, %v559
    %561 = vmatmul.f32.gmra.mxu0 %v537
    %v562 = vpop.f32.mrf.mxu0
    %v563 = vadd.f32 0.0, %v562
    %564 = vmatmul.f32.gmra.mxu0 %v540
    %v565 = vpop.f32.mrf.mxu0
    %v566 = vadd.f32 0.0, %v565
    %567 = vdwg.mxu0
    %v568 = vsel %vm349, %v560, -inf
    %v569 = vsel %vm349, %v563, -inf
    %v570 = vsel %vm352, %v566, -inf
    %v571 = vmax.f32 %v568, %v569
    %v572 = vmax.f32 %v571, %v570
    %v573 = vrot.slane %v572, 4
    %v574 = vmax.f32 %v572, %v573
    %v575 = vrot.slane %v574, 2
    %v576 = vmax.f32 %v574, %v575
    %v577 = vrot.slane %v576, 1
    %v578 = vmax.f32 %v576, %v577
    %v579 = vsub.f32 %v560, %v578
    %v580 = vsub.f32 %v563, %v578
    %v581 = vsub.f32 %v566, %v578
    %v582 = vmul.f32 %v579, 1.442695
    %v583 = vpow.pop %v582
    %v584 = vmul.f32 %v580, 1.442695
    %v585 = vpow.pop %v584
    %v586 = vmul.f32 %v581, 1.442695
    %v587 = vpow.pop %v586
    %v588 = vsel %vm349, %v583, 0.0
    %v589 = vsel %vm349, %v585, 0.0
    %v590 = vadd.f32 %v588, %v589
    %v591 = vsel %vm352, %v587, 0.0
    %v592 = vadd.f32 %v590, %v591
    %v593 = vrot.slane %v592, 4
    %v594 = vadd.f32 %v592, %v593
    %v595 = vrot.slane %v594, 2
    %v596 = vadd.f32 %v594, %v595
    %v597 = vrot.slane %v596, 1
    %v598 = vadd.f32 %v596, %v597
    %v599 = vrcp.pop %v598
    %v600 = vmul.f32 %v598, %v599
    %v601 = vsub.f32 1.0, %v600
    %v602 = vmul.f32 %v599, %v601
    %v603 = vadd.f32 %v599, %v602
    %vm604 = vweird.f32 %v598
    %vm605 = vweird.f32 %v599
    %vm606 = vmor %vm604, %vm605
    %v607 = vsel %vm606, %v599, %v603
    %v608 = vand.u32 2147483647, %v598
    %vm609 = vcmp.eq.f32.partialorder %v608, 8.507059e+37
    %v610 = vand.u32 %v598, 2147483648
    %v611 = vor.u32 1.1754944e-38, %v610
    %v612 = vsel %vm609, %v611, %v607
    %v613 = vmul.f32 %v583, %v612
    %v614 = vmul.f32 %v585, %v612
    %v615 = vmul.f32 %v587, %v612
    %v617 = vsel %vm349, %v613, 0
    %v620 = vsel %vm349, %v614, 0
    %v623 = vsel %vm349, %v615, 0
    %625 = vmatpush.xpose.msra.mxu0 0.0
    %626 = vmatpush.xpose.msra.mxu0 0.0
    %627 = vmatpush.xpose.msra.mxu0 0.0
    %628 = vmatpush.xpose.msra.mxu0 0.0
    %629 = vmatpush.xpose.msra.mxu0 0.0
    %630 = vmatpush.xpose.msra.mxu0 0.0
    %631 = vmatpush.xpose.msra.mxu0 0.0
    %632 = vmatpush.xpose.msra.mxu0 0.0
    %633 = vmatpush.xpose.msra.mxu0 0.0
    %634 = vmatpush.xpose.msra.mxu0 0.0
    %635 = vmatpush.xpose.msra.mxu0 0.0
    %636 = vmatpush.xpose.msra.mxu0 0.0
    %637 = vmatpush.xpose.msra.mxu0 %v418
    %638 = vmatpush.xpose.msra.mxu0 %v415
    %639 = vmatpush.xpose.msra.mxu0 %v412
    %640 = vmatpush.xpose.msra.mxu0 %v409
    %641 = vmatmul.f32.gmra.mxu0 %v617
    %v642 = vpop.f32.mrf.mxu0
    %v643 = vadd.f32 0.0, %v642
    %644 = vmatmul.f32.gmra.mxu0 %v620
    %v645 = vpop.f32.mrf.mxu0
    %v646 = vadd.f32 0.0, %v645
    %647 = vmatmul.f32.gmra.mxu0 %v623
    %v648 = vpop.f32.mrf.mxu0
    %v649 = vadd.f32 0.0, %v648
    %650 = vdwg.mxu0
    %v651 = vmul.f32 %v643, %v521
    %v652 = vmul.f32 %v646, %v524
    %v653 = vmul.f32 %v649, %v527
    %v654 = vsel %vm137, %v651, 0.0
    %v655 = vsel %vm137, %v652, 0.0
    %v656 = vadd.f32 %v654, %v655
    %v657 = vsel %vm452, %v653, 0.0
    %v658 = vadd.f32 %v656, %v657
    %v659 = vrot.slane %v658, 4
    %v660 = vadd.f32 %v658, %v659
    %v661 = vrot.slane %v660, 2
    %v662 = vadd.f32 %v660, %v661
    %v663 = vrot.slane %v662, 1
    %v664 = vadd.f32 %v662, %v663
    %v665 = vsel %vm207, %v460, %v664
    %v667 = vperm.slane %v100, 0
    %v670 = vsel %vm137, %v665, 0
    %672 = vmatpush.msra.mxu0 0.0
    %673 = vmatpush.msra.mxu0 0.0
    %674 = vmatpush.msra.mxu0 0.0
    %675 = vmatpush.msra.mxu0 0.0
    %676 = vmatpush.msra.mxu0 0.0
    %677 = vmatpush.msra.mxu0 0.0
    %678 = vmatpush.msra.mxu0 0.0
    %679 = vmatpush.msra.mxu0 0.0
    %680 = vmatpush.msra.mxu0 0.0
    %681 = vmatpush.msra.mxu0 0.0
    %682 = vmatpush.msra.mxu0 0.0
    %683 = vmatpush.msra.mxu0 0.0
    %684 = vmatpush.msra.mxu0 %v96
    %685 = vmatpush.msra.mxu0 %v95
    %686 = vmatpush.msra.mxu0 %v94
    %687 = vmatpush.msra.mxu0 %v93
    %688 = vmatmul.f32.gmra.mxu0 %v670
    %v689 = vpop.f32.mrf.mxu0
    %v690 = vadd.f32 %v667, %v689
    %691 = vdwg.mxu0
    %vm692 = vcmask 254976
    %693 = vst.msk [vmem:[#allocation7] sm:$0x3] %vm692, %v690
    // Predicated region
    $region58: #{tpu_custom_call.1} parent=1 // pred_check
      _
    $region59: #{tpu_custom_call.1} parent=1 // pred_check_branch
      %695 = sbr.rel (0) target = $region61
    $region60: #{tpu_custom_call.1} parent=1 // pred_region
      %697 = vsyncadd [#allocation4], 0
      %s699 = sshll.u32 [#allocation7], 4
      %s700 = int_to_ptr.vmem [resolvable:$true] %s699
      %s701 = sshll.u32 %s12, 4
      %s702 = int_to_ptr.hbm [resolvable:$true] %s701
      %704 = dma.vmem_to_hbm [thread:$0]  %s700, 32, %s702, [#allocation4]
    $region61: #{tpu_custom_call.1} parent=1 // pred_fallthru
      _
    // Predicated region
    $region62: #{tpu_custom_call.1} parent=1 // pred_check
      _
    $region63: #{tpu_custom_call.1} parent=1 // pred_check_branch
      %706 = sbr.rel (0) target = $region65
    $region64: #{tpu_custom_call.1} parent=1 // pred_region
      %708 = dma.done [#allocation4], 32
    $region65: #{tpu_custom_call.1} parent=1 // pred_fallthru
      _
    %709 = vsyncpa [#allocation3], 1
    %710 = vsyncpa [#allocation6], 1
    %711 = vsyncpa [#allocation4], 1

</llo_original>
